<compile_context>
chip_gen: v7x
topology: tpu7x:2x2x1
jax: 0.10.0
libtpu: 0.0.40
codegen_flags: <defaults>
</compile_context>

<pallas_src>
import functools

import jax
import jax.numpy as jnp
from jax.experimental import pallas as pl
from jax.experimental.pallas import tpu as pltpu


HIDDEN = 64  # fixed by the module: Linear(in_dim, 64) -> ReLU -> Linear(64, out_dim)


def _mlp_kernel(x_ref, w1_ref, b1_ref, w2_ref, b2_ref, out_ref):
    """One batch tile of the fused (row-packed) MLP: relu(x @ W1 + b1) @ W2 + b2.

    x arrives f32 and is cast to bf16 in-kernel (VPU cast rides otherwise-free
    VALU slots and avoids a separate wrapper-side HBM cast pass); weights are
    bf16 (MXU-native); bias add / ReLU / accumulation stay f32.
    """
    x = x_ref[...].astype(jnp.bfloat16)                       # (TB, P*in_dim)
    h = jnp.dot(x, w1_ref[...], preferred_element_type=jnp.float32)
    h = jnp.maximum(h + b1_ref[...], 0.0)                     # f32 bias + ReLU
    y = jnp.dot(h.astype(jnp.bfloat16), w2_ref[...],
                preferred_element_type=jnp.float32)
    out_ref[...] = (y + b2_ref[...]).astype(out_ref.dtype)


def _round_up(n, m):
    return (n + m - 1) // m * m


def _block_diag(w, p):
    """(k, n) -> (p*k, p*n): block-diagonal matrix with p copies of w."""
    k, n = w.shape
    eye = jnp.eye(p, dtype=w.dtype)
    return (eye[:, None, :, None] * w[None, :, None, :]).reshape(p * k, p * n)


def _default_pack():
    """Rows packed per lane-row; match MXU width (128 on v4/v5, 256 on v6e/v7x)."""
    try:
        kind = jax.devices()[0].device_kind.lower()
    except Exception:
        return 8
    return 4 if ("v4" in kind or "v5" in kind) else 8


@functools.partial(jax.jit, static_argnames=("block_b", "pack"))
def _feedforward_nn_impl(x, w1, b1, w2, b2, *, block_b, pack):
    B, in_dim = x.shape
    hidden, out_dim = w2.shape
    P = pack

    # --- Row packing: P batch rows per lane-row, block-diagonal weights. ---
    b_pad = _round_up(B, P)
    if b_pad != B:                      # remainder-only pad (< P rows)
        x = jnp.pad(x, ((0, b_pad - B), (0, 0)))
    R = b_pad // P
    x_pk = x.reshape(R, P * in_dim)     # free: row-major contiguous
    r_pad = _round_up(R, 8)             # sublane alignment for the batch tile
    if r_pad != R:                      # at most 7 extra packed rows
        x_pk = jnp.pad(x_pk, ((0, r_pad - R), (0, 0)))

    # Packed, VMEM-resident weights (bf16 MXU operands) and f32 biases.
    w1_pk = _block_diag(w1, P).astype(jnp.bfloat16)            # (P*in,  P*hid)
    w2_pk = _block_diag(w2, P).astype(jnp.bfloat16)            # (P*hid, P*out)
    b1_pk = jnp.tile(b1.astype(jnp.float32), P).reshape(1, P * hidden)
    b2_pk = jnp.tile(b2.astype(jnp.float32), P).reshape(1, P * out_dim)

    # --- Batch tile (in packed rows). ---
    tb = min(_round_up(block_b, 16), r_pad)
    if r_pad >= 32:
        # Keep >=2 grid steps so v7x's two TensorCores both get work
        # (no-op on single-core v5e/v6e).
        tb = min(tb, _round_up(-(-r_pad // 2), 16))
    grid = (pl.cdiv(r_pad, tb),)

    resident = lambda a: pl.BlockSpec(a.shape, lambda i: (0, 0))

    flops = 2 * r_pad * (P * in_dim * P * hidden + P * hidden * P * out_dim)
    bytes_accessed = (x_pk.size * 4 + w1_pk.size * 2 + w2_pk.size * 2
                      + b1_pk.size * 4 + b2_pk.size * 4
                      + r_pad * P * out_dim * 4)

    out = pl.pallas_call(
        _mlp_kernel,
        out_shape=jax.ShapeDtypeStruct((r_pad, P * out_dim), jnp.float32),
        grid=grid,
        in_specs=[
            pl.BlockSpec((tb, P * in_dim), lambda i: (i, 0)),   # streamed batch tile
            resident(w1_pk),                                    # weights stay in VMEM
            resident(b1_pk),
            resident(w2_pk),
            resident(b2_pk),
        ],
        out_specs=pl.BlockSpec((tb, P * out_dim), lambda i: (i, 0)),
        compiler_params=pltpu.CompilerParams(
            dimension_semantics=("parallel",),                  # v7x: shard batch over 2 TCs
            vmem_limit_bytes=48 * 1024 * 1024),
        cost_estimate=pl.CostEstimate(
            flops=flops, transcendentals=0, bytes_accessed=bytes_accessed),
    )(x_pk, w1_pk, b1_pk, w2_pk, b2_pk)

    # Unpack: (R, P*out_dim) -> (B, out_dim); padded rows are sliced off.
    return out[:R].reshape(b_pad, out_dim)[:B]


def feedforward_nn(x, w1, b1, w2, b2, *, block_b=2048, pack=None):
    """Pallas wrapper: row-packed fused MLP with VMEM-resident block-diag weights."""
    if pack is None:
        pack = _default_pack()
    return _feedforward_nn_impl(x, w1, b1, w2, b2, block_b=block_b, pack=pack)


def init_params(key, in_dim, hidden, out_dim):
    """Deterministic init mimicking torch.nn.Linear default
    (uniform(-1/sqrt(fan_in), 1/sqrt(fan_in)) for both weight and bias)."""
    k1, k2, k3, k4 = jax.random.split(key, 4)
    lim1 = 1.0 / jnp.sqrt(in_dim)
    lim2 = 1.0 / jnp.sqrt(hidden)
    w1 = jax.random.uniform(k1, (in_dim, hidden), jnp.float32, -lim1, lim1)
    b1 = jax.random.uniform(k2, (hidden,), jnp.float32, -lim1, lim1)
    w2 = jax.random.uniform(k3, (hidden, out_dim), jnp.float32, -lim2, lim2)
    b2 = jax.random.uniform(k4, (out_dim,), jnp.float32, -lim2, lim2)
    return w1, b1, w2, b2


if __name__ == "__main__":
    # Small shapes consistent with the module: obs batch of 8, in_dim=32,
    # hidden=64 (fixed by the module), out_dim=8.
    B, IN_DIM, OUT_DIM = 8, 32, 8

    key = jax.random.PRNGKey(0)
    kx, kp = jax.random.split(key)
    x = jax.random.normal(kx, (B, IN_DIM), jnp.float32)
    w1, b1, w2, b2 = init_params(kp, IN_DIM, HIDDEN, OUT_DIM)

    out = feedforward_nn(x, w1, b1, w2, b2)
    out = jax.block_until_ready(out)

    # Pure-JAX f32 reference; tolerance loosened for the bf16 matmul operands.
    ref = jnp.maximum(x @ w1 + b1, 0.0) @ w2 + b2
    assert out.shape == (B, OUT_DIM)
    assert jnp.allclose(out, ref, atol=3e-2, rtol=3e-2), \
        float(jnp.max(jnp.abs(out - ref)))

    print("KERNEL_OK")
</pallas_src>

<mosaic_0001>
module attributes {stable_mosaic.version = 11 : i64} {
  func.func @_mlp_kernel(%arg0: i32, %arg1: memref<8x256xf32, #tpu.memory_space<vmem>>, %arg2: memref<256x512xbf16, #tpu.memory_space<vmem>>, %arg3: memref<1x512xf32, #tpu.memory_space<vmem>>, %arg4: memref<512x64xbf16, #tpu.memory_space<vmem>>, %arg5: memref<1x64xf32, #tpu.memory_space<vmem>>, %arg6: memref<8x64xf32, #tpu.memory_space<vmem>>) attributes {dimension_semantics = [#tpu.dimension_semantics<parallel>], iteration_bounds = array<i64: 1>, scalar_prefetch = 0 : i64, scratch_operands = 0 : i64, tpu.core_type = #tpu.core_type<tc>, window_params = [{transform_indices = @transform_0, window_bounds = array<i64: 8, 256>}, {pipeline_mode = #tpu.pipeline_mode<synchronous>, transform_indices = @transform_1, window_bounds = array<i64: 256, 512>}, {pipeline_mode = #tpu.pipeline_mode<synchronous>, transform_indices = @transform_2, window_bounds = array<i64: 1, 512>}, {pipeline_mode = #tpu.pipeline_mode<synchronous>, transform_indices = @transform_3, window_bounds = array<i64: 512, 64>}, {pipeline_mode = #tpu.pipeline_mode<synchronous>, transform_indices = @transform_4, window_bounds = array<i64: 1, 64>}, {transform_indices = @transform_5, window_bounds = array<i64: 8, 64>}]} {
    %c0 = arith.constant 0 : index
    %c0_0 = arith.constant 0 : index
    %0 = vector.load %arg1[%c0, %c0_0] : memref<8x256xf32, #tpu.memory_space<vmem>>, vector<8x256xf32>
    %1 = arith.truncf %0 : vector<8x256xf32> to vector<8x256xbf16>
    %c0_1 = arith.constant 0 : index
    %c0_2 = arith.constant 0 : index
    %2 = vector.load %arg2[%c0_1, %c0_2] : memref<256x512xbf16, #tpu.memory_space<vmem>>, vector<256x512xbf16>
    %cst = arith.constant dense<0.000000e+00> : vector<8x512xf32>
    %3 = tpu.matmul %1, %2, %cst {dimension_numbers = #tpu.dot_dimension_numbers<[1], [0], [0], [1], [0, 0, 1, 1], [], []>} : vector<8x256xbf16>, vector<256x512xbf16>, vector<8x512xf32> -> vector<8x512xf32>
    %c0_3 = arith.constant 0 : index
    %c0_4 = arith.constant 0 : index
    %4 = vector.load %arg3[%c0_3, %c0_4] : memref<1x512xf32, #tpu.memory_space<vmem>>, vector<1x512xf32>
    %5 = vector.broadcast %4 : vector<1x512xf32> to vector<8x512xf32>
    %6 = arith.addf %3, %5 : vector<8x512xf32>
    %cst_5 = arith.constant 0.000000e+00 : f32
    %7 = vector.broadcast %cst_5 : f32 to vector<8x512xf32>
    %8 = arith.maximumf %6, %7 : vector<8x512xf32>
    %9 = arith.truncf %8 : vector<8x512xf32> to vector<8x512xbf16>
    %c0_6 = arith.constant 0 : index
    %c0_7 = arith.constant 0 : index
    %10 = vector.load %arg4[%c0_6, %c0_7] : memref<512x64xbf16, #tpu.memory_space<vmem>>, vector<512x64xbf16>
    %cst_8 = arith.constant dense<0.000000e+00> : vector<8x64xf32>
    %11 = tpu.matmul %9, %10, %cst_8 {dimension_numbers = #tpu.dot_dimension_numbers<[1], [0], [0], [1], [0, 0, 1, 1], [], []>} : vector<8x512xbf16>, vector<512x64xbf16>, vector<8x64xf32> -> vector<8x64xf32>
    %c0_9 = arith.constant 0 : index
    %c0_10 = arith.constant 0 : index
    %12 = vector.load %arg5[%c0_9, %c0_10] : memref<1x64xf32, #tpu.memory_space<vmem>>, vector<1x64xf32>
    %13 = vector.broadcast %12 : vector<1x64xf32> to vector<8x64xf32>
    %14 = arith.addf %11, %13 : vector<8x64xf32>
    %c0_11 = arith.constant 0 : index
    %c0_12 = arith.constant 0 : index
    %15 = vector.load %arg6[%c0_11, %c0_12] : memref<8x64xf32, #tpu.memory_space<vmem>>, vector<8x64xf32>
    tpu.vector_store %arg6[%c0_11, %c0_12], %14 {strides = array<i32>} : memref<8x64xf32, #tpu.memory_space<vmem>>, vector<8x64xf32>,
    return
  }
  func.func @transform_0(%arg0: i32) -> (i32, i32) {
    %c0_i32 = arith.constant 0 : i32
    %c0_i32_0 = arith.constant 0 : i32
    return %arg0, %c0_i32 : i32, i32
  }
  func.func @transform_1(%arg0: i32) -> (i32, i32) {
    %c0_i32 = arith.constant 0 : i32
    %c0_i32_0 = arith.constant 0 : i32
    %c0_i32_1 = arith.constant 0 : i32
    return %c0_i32, %c0_i32_0 : i32, i32
  }
  func.func @transform_2(%arg0: i32) -> (i32, i32) {
    %c0_i32 = arith.constant 0 : i32
    %c0_i32_0 = arith.constant 0 : i32
    %c0_i32_1 = arith.constant 0 : i32
    return %c0_i32, %c0_i32_0 : i32, i32
  }
  func.func @transform_3(%arg0: i32) -> (i32, i32) {
    %c0_i32 = arith.constant 0 : i32
    %c0_i32_0 = arith.constant 0 : i32
    %c0_i32_1 = arith.constant 0 : i32
    return %c0_i32, %c0_i32_0 : i32, i32
  }
  func.func @transform_4(%arg0: i32) -> (i32, i32) {
    %c0_i32 = arith.constant 0 : i32
    %c0_i32_0 = arith.constant 0 : i32
    %c0_i32_1 = arith.constant 0 : i32
    return %c0_i32, %c0_i32_0 : i32, i32
  }
  func.func @transform_5(%arg0: i32) -> (i32, i32) {
    %c0_i32 = arith.constant 0 : i32
    %c0_i32_0 = arith.constant 0 : i32
    return %arg0, %c0_i32 : i32, i32
  }
}

</mosaic_0001>

<llo_original>
// kernel: tile.13
$region0: #{tile.13}
  #allocation0 [shape = 's32[1]{0}', space=sflag, size = 0x4, scoped, tag = 'scoped memory for tile.13']
  %s0 = inlined_call_operand.vmem [shape: f32[64], index: 0, kind: input, shape index: {}]
  %s1 = inlined_call_operand.vmem [shape: f32[8,64], index: 1, kind: output, shape index: {}]
  // Predicated region
  $region2: #{tile.13} parent=0 // pred_check
    _
  $region3: #{tile.13} parent=0 // pred_check_branch
    %3 = sbr.rel (0) target = $region5
  $region4: #{tile.13} parent=0 // pred_region
    _
  $region5: #{tile.13} parent=0 // pred_fallthru
    _
  %v4 = vld [vmem:[%s0] ss:$0 sm:$0xff]
  %5 = vst [vmem:[%s1] sm:$0xff] %v4

// kernel: tile.14
$region0: #{tile.14}
  %s0 = inlined_call_operand.vmem [shape: f32[8,64], index: 0, kind: input, shape index: {}]
  %s1 = inlined_call_operand.vmem [shape: f32[1,512], index: 1, kind: output, shape index: {}]
  $region1: #{tile.14} parent=0
    #allocation0 [shape = 'u8[16384]{0}', space=vmem, size = 0x4000, scoped, tag = 'scoped mem for output reshape']
    %v2 = vld [vmem:[%s0] ss:$2 sm:$0xf]
    %vm3 = vcmask 523264
    %4 = vst.msk [vmem:[#allocation0] ss:$8 sm:$0xf] %vm3, %v2
    %s5 = scalar_lea.vmem %s0, 1
    %v6 = vld [vmem:[%s5] ss:$2 sm:$0xf]
    %7 = vrot.lane.b32.xlu0 %v6, 64
    %v8 = vpop.permute.xlu0 %7
    %vm9 = vcmask 1048064
    %10 = vst.msk [vmem:[#allocation0] ss:$8 sm:$0xf] %vm9, %v8
    %s12 = sshllo.u32 0, 1
    %v14 = vld [vmem:[#allocation0] sm:%s12]
    %s15 = sshllo.u32 0, 1
    %16 = vst [vmem:[%s1] sm:%s15] %v14
    %s17 = scalar_lea.vmem [#allocation0], 8
    %v18 = vld [vmem:[%s17] sm:%s12]
    %s19 = sshllo.u32 0, 1
    %s20 = scalar_lea.vmem %s1, 1
    %21 = vst [vmem:[%s20] sm:%s19] %v18
    %s22 = scalar_lea.vmem [#allocation0], 16
    %v23 = vld [vmem:[%s22] sm:%s12]
    %s24 = sshllo.u32 0, 1
    %s25 = smul.addr 1, 2
    %s26 = scalar_lea.vmem %s1, %s25
    %27 = vst [vmem:[%s26] sm:%s24] %v23
    %s28 = scalar_lea.vmem [#allocation0], 24
    %v29 = vld [vmem:[%s28] sm:%s12]
    %s30 = sshllo.u32 0, 1
    %s31 = smul.addr 1, 3
    %s32 = scalar_lea.vmem %s1, %s31
    %33 = vst [vmem:[%s32] sm:%s30] %v29

// kernel: tile.18
$region0: #{tile.18}
  #allocation0 [shape = 's32[1]{0}', space=sflag, size = 0x4, scoped, tag = 'scoped memory for tile.18']
  %s0 = inlined_call_operand.vmem [shape: f32[8], index: 0, kind: input, shape index: {}]
  %s1 = inlined_call_operand.vmem [shape: f32[8,8], index: 1, kind: output, shape index: {}]
  // Predicated region
  $region2: #{tile.18} parent=0 // pred_check
    _
  $region3: #{tile.18} parent=0 // pred_check_branch
    %3 = sbr.rel (0) target = $region5
  $region4: #{tile.18} parent=0 // pred_region
    _
  $region5: #{tile.18} parent=0 // pred_fallthru
    _
  %v4 = vld [vmem:[%s0] ss:$0 sm:$0xff]
  %5 = vst [vmem:[%s1] sm:$0xff] %v4

// kernel: tile.19
$region0: #{tile.19}
  %s0 = inlined_call_operand.vmem [shape: f32[8,8], index: 0, kind: input, shape index: {}]
  %s1 = inlined_call_operand.vmem [shape: f32[1,64], index: 1, kind: output, shape index: {}]
  $region1: #{tile.19} parent=0
    #allocation0 [shape = 'u8[4096]{0}', space=vmem, size = 0x1000, scoped, tag = 'scoped mem for output reshape']
    %v2 = vld [vmem:[%s0] sm:$0x1]
    %vm3 = vcmask 64512
    %4 = vst.msk [vmem:[#allocation0] sm:$0x1] %vm3, %v2
    %s5 = scalar_lea.vmem %s0, 7
    %v6 = vld [vmem:[%s5] sm:$0x1]
    %7 = vrot.lane.b32.xlu0 %v6, 56
    %v8 = vpop.permute.xlu0 %7
    %vm9 = vcmask 523712
    %10 = vst.msk [vmem:[#allocation0] sm:$0x1] %vm9, %v8
    %s11 = scalar_lea.vmem %s0, 6
    %v12 = vld [vmem:[%s11] sm:$0x1]
    %13 = vrot.lane.b32.xlu0 %v12, 48
    %v14 = vpop.permute.xlu0 %13
    %vm15 = vcmask 458112
    %16 = vst.msk [vmem:[#allocation0] sm:$0x1] %vm15, %v14
    %s17 = scalar_lea.vmem %s0, 5
    %v18 = vld [vmem:[%s17] sm:$0x1]
    %19 = vrot.lane.b32.xlu0 %v18, 40
    %v20 = vpop.permute.xlu0 %19
    %vm21 = vcmask 392512
    %22 = vst.msk [vmem:[#allocation0] sm:$0x1] %vm21, %v20
    %s23 = scalar_lea.vmem %s0, 4
    %v24 = vld [vmem:[%s23] sm:$0x1]
    %25 = vrot.lane.b32.xlu0 %v24, 32
    %v26 = vpop.permute.xlu0 %25
    %vm27 = vcmask 326912
    %28 = vst.msk [vmem:[#allocation0] sm:$0x1] %vm27, %v26
    %s29 = scalar_lea.vmem %s0, 3
    %v30 = vld [vmem:[%s29] sm:$0x1]
    %31 = vrot.lane.b32.xlu0 %v30, 24
    %v32 = vpop.permute.xlu0 %31
    %vm33 = vcmask 261312
    %34 = vst.msk [vmem:[#allocation0] sm:$0x1] %vm33, %v32
    %s35 = scalar_lea.vmem %s0, 2
    %v36 = vld [vmem:[%s35] sm:$0x1]
    %37 = vrot.lane.b32.xlu0 %v36, 16
    %v38 = vpop.permute.xlu0 %37
    %vm39 = vcmask 195712
    %40 = vst.msk [vmem:[#allocation0] sm:$0x1] %vm39, %v38
    %s41 = scalar_lea.vmem %s0, 1
    %v42 = vld [vmem:[%s41] sm:$0x1]
    %43 = vrot.lane.b32.xlu0 %v42, 8
    %v44 = vpop.permute.xlu0 %43
    %vm45 = vcmask 130112
    %46 = vst.msk [vmem:[#allocation0] sm:$0x1] %vm45, %v44
    %s48 = sshllo.u32 0, 1
    %v50 = vld [vmem:[#allocation0] sm:%s48]
    %s51 = sshllo.u32 0, 1
    %52 = vst [vmem:[%s1] sm:%s51] %v50

// kernel: _feedforward_nn_impl.1
$region0: #{_feedforward_nn_impl.1}
  #allocation0 [shape = 'u32[]', space=smem, size = 0x4, offset = 0x4, fixed_abs, tag = 'smem constant byte address 0x4 - core index']
  #allocation1 [shape = 'u32[144,128]{1,0:T(1,128)}', space=vmem, size = 0x12000, scoped, tag = 'internal scratch']
  %s0 = inlined_call_operand.vmem [shape: f32[8,256], index: 0, kind: input, shape index: {}]
  %s1 = inlined_call_operand.vmem [shape: bf16[256,512], index: 1, kind: input, shape index: {}]
  %s2 = inlined_call_operand.vmem [shape: f32[1,512], index: 2, kind: input, shape index: {}]
  %s3 = inlined_call_operand.vmem [shape: bf16[512,64], index: 3, kind: input, shape index: {}]
  %s4 = inlined_call_operand.vmem [shape: f32[1,64], index: 4, kind: input, shape index: {}]
  %s5 = inlined_call_operand.vmem [shape: f32[8,64], index: 5, kind: output, shape index: {}]
  %s6 = sld [smem:[#allocation0]]
  $region30: #{_feedforward_nn_impl.1} parent=0
    _
  %s8 = ssub.s32 1, %s6
  %s9 = scalar_select 0, %s8, %s6
  // Predicated region
  $region2: #{_feedforward_nn_impl.1} parent=0 // pred_check
    _
  $region3: #{_feedforward_nn_impl.1} parent=0 // pred_check_branch
    %11 = sbr.rel (0) target = $region5
  $region4: #{_feedforward_nn_impl.1} parent=0 // pred_region
    _
  $region5: #{_feedforward_nn_impl.1} parent=0 // pred_fallthru
    _
  // Predicated region
  $region6: #{_feedforward_nn_impl.1} parent=0 // pred_check
    _
  $region7: #{_feedforward_nn_impl.1} parent=0 // pred_check_branch
    %13 = sbr.rel (0) target = $region9
  $region8: #{_feedforward_nn_impl.1} parent=0 // pred_region
    _
  $region9: #{_feedforward_nn_impl.1} parent=0 // pred_fallthru
    _
  // Predicated region
  $region10: #{_feedforward_nn_impl.1} parent=0 // pred_check
    _
  $region11: #{_feedforward_nn_impl.1} parent=0 // pred_check_branch
    %15 = sbr.rel (0) target = $region13
  $region12: #{_feedforward_nn_impl.1} parent=0 // pred_region
    _
  $region13: #{_feedforward_nn_impl.1} parent=0 // pred_fallthru
    _
  // Predicated region
  $region14: #{_feedforward_nn_impl.1} parent=0 // pred_check
    _
  $region15: #{_feedforward_nn_impl.1} parent=0 // pred_check_branch
    %17 = sbr.rel (0) target = $region17
  $region16: #{_feedforward_nn_impl.1} parent=0 // pred_region
    _
  $region17: #{_feedforward_nn_impl.1} parent=0 // pred_fallthru
    _
  // Predicated region
  $region18: #{_feedforward_nn_impl.1} parent=0 // pred_check
    _
  $region19: #{_feedforward_nn_impl.1} parent=0 // pred_check_branch
    %19 = sbr.rel (0) target = $region21
  $region20: #{_feedforward_nn_impl.1} parent=0 // pred_region
    _
  $region21: #{_feedforward_nn_impl.1} parent=0 // pred_fallthru
    _
  %v21 = vld [vmem:[%s0] sm:$0xff]
  %v22 = vld [vmem:[%s0 + $0x8] sm:$0xff]
  %v23 = vpack.c.bf16 %v21, %v21
  %v24 = vpack.c.bf16 %v22, %v22
  %v25 = vld [vmem:[%s1] sm:$0xff]
  %v26 = vld [vmem:[%s1 + $0x8] sm:$0xff]
  %v27 = vld [vmem:[%s1 + $0x10] sm:$0xff]
  %v28 = vld [vmem:[%s1 + $0x18] sm:$0xff]
  %v29 = vld [vmem:[%s1 + $0x20] sm:$0xff]
  %v30 = vld [vmem:[%s1 + $0x28] sm:$0xff]
  %v31 = vld [vmem:[%s1 + $0x30] sm:$0xff]
  %v32 = vld [vmem:[%s1 + $0x38] sm:$0xff]
  %v33 = vld [vmem:[%s1 + $0x40] sm:$0xff]
  %v34 = vld [vmem:[%s1 + $0x48] sm:$0xff]
  %v35 = vld [vmem:[%s1 + $0x50] sm:$0xff]
  %v36 = vld [vmem:[%s1 + $0x58] sm:$0xff]
  %v37 = vld [vmem:[%s1 + $0x60] sm:$0xff]
  %v38 = vld [vmem:[%s1 + $0x68] sm:$0xff]
  %v39 = vld [vmem:[%s1 + $0x70] sm:$0xff]
  %v40 = vld [vmem:[%s1 + $0x78] sm:$0xff]
  %v41 = vld [vmem:[%s1 + $0x80] sm:$0xff]
  %v42 = vld [vmem:[%s1 + $0x88] sm:$0xff]
  %v43 = vld [vmem:[%s1 + $0x90] sm:$0xff]
  %v44 = vld [vmem:[%s1 + $0x98] sm:$0xff]
  %v45 = vld [vmem:[%s1 + $0xa0] sm:$0xff]
  %v46 = vld [vmem:[%s1 + $0xa8] sm:$0xff]
  %v47 = vld [vmem:[%s1 + $0xb0] sm:$0xff]
  %v48 = vld [vmem:[%s1 + $0xb8] sm:$0xff]
  %v49 = vld [vmem:[%s1 + $0xc0] sm:$0xff]
  %v50 = vld [vmem:[%s1 + $0xc8] sm:$0xff]
  %v51 = vld [vmem:[%s1 + $0xd0] sm:$0xff]
  %v52 = vld [vmem:[%s1 + $0xd8] sm:$0xff]
  %v53 = vld [vmem:[%s1 + $0xe0] sm:$0xff]
  %v54 = vld [vmem:[%s1 + $0xe8] sm:$0xff]
  %v55 = vld [vmem:[%s1 + $0xf0] sm:$0xff]
  %v56 = vld [vmem:[%s1 + $0xf8] sm:$0xff]
  %v57 = vld [vmem:[%s1 + $0x100] sm:$0xff]
  %v58 = vld [vmem:[%s1 + $0x108] sm:$0xff]
  %v59 = vld [vmem:[%s1 + $0x110] sm:$0xff]
  %v60 = vld [vmem:[%s1 + $0x118] sm:$0xff]
  %v61 = vld [vmem:[%s1 + $0x120] sm:$0xff]
  %v62 = vld [vmem:[%s1 + $0x128] sm:$0xff]
  %v63 = vld [vmem:[%s1 + $0x130] sm:$0xff]
  %v64 = vld [vmem:[%s1 + $0x138] sm:$0xff]
  %v65 = vld [vmem:[%s1 + $0x140] sm:$0xff]
  %v66 = vld [vmem:[%s1 + $0x148] sm:$0xff]
  %v67 = vld [vmem:[%s1 + $0x150] sm:$0xff]
  %v68 = vld [vmem:[%s1 + $0x158] sm:$0xff]
  %v69 = vld [vmem:[%s1 + $0x160] sm:$0xff]
  %v70 = vld [vmem:[%s1 + $0x168] sm:$0xff]
  %v71 = vld [vmem:[%s1 + $0x170] sm:$0xff]
  %v72 = vld [vmem:[%s1 + $0x178] sm:$0xff]
  %v73 = vld [vmem:[%s1 + $0x180] sm:$0xff]
  %v74 = vld [vmem:[%s1 + $0x188] sm:$0xff]
  %v75 = vld [vmem:[%s1 + $0x190] sm:$0xff]
  %v76 = vld [vmem:[%s1 + $0x198] sm:$0xff]
  %v77 = vld [vmem:[%s1 + $0x1a0] sm:$0xff]
  %v78 = vld [vmem:[%s1 + $0x1a8] sm:$0xff]
  %v79 = vld [vmem:[%s1 + $0x1b0] sm:$0xff]
  %v80 = vld [vmem:[%s1 + $0x1b8] sm:$0xff]
  %v81 = vld [vmem:[%s1 + $0x1c0] sm:$0xff]
  %v82 = vld [vmem:[%s1 + $0x1c8] sm:$0xff]
  %v83 = vld [vmem:[%s1 + $0x1d0] sm:$0xff]
  %v84 = vld [vmem:[%s1 + $0x1d8] sm:$0xff]
  %v85 = vld [vmem:[%s1 + $0x1e0] sm:$0xff]
  %v86 = vld [vmem:[%s1 + $0x1e8] sm:$0xff]
  %v87 = vld [vmem:[%s1 + $0x1f0] sm:$0xff]
  %v88 = vld [vmem:[%s1 + $0x1f8] sm:$0xff]
  %v89 = vld [vmem:[%s2] sm:$0xf]
  %v91 = vlaneseq
  %v92 = vshrl.u32 %v91, 7
  %v93 = vsub.s32 0, %v92
  %v94 = vrot.slane %v89, %v93
  %v95 = vlaneseq
  %v96 = vshrl.u32 %v95, 7
  %v97 = vsub.s32 1, %v96
  %v98 = vrot.slane %v89, %v97
  %v99 = vlaneseq
  %v100 = vshrl.u32 %v99, 7
  %v101 = vsub.s32 2, %v100
  %v102 = vrot.slane %v89, %v101
  %v103 = vlaneseq
  %v104 = vshrl.u32 %v103, 7
  %v105 = vsub.s32 3, %v104
  %v106 = vrot.slane %v89, %v105
  %v175 = vunpack.c.l.b16 %v25
  %v176 = vunpack.c.h.b16 %v25
  %v177 = vunpack.c.l.b16 %v26
  %v178 = vunpack.c.h.b16 %v26
  %v179 = vunpack.c.l.b16 %v27
  %v180 = vunpack.c.h.b16 %v27
  %v181 = vunpack.c.l.b16 %v28
  %v182 = vunpack.c.h.b16 %v28
  %v183 = vunpack.c.l.b16 %v29
  %v184 = vunpack.c.h.b16 %v29
  %v185 = vunpack.c.l.b16 %v30
  %v186 = vunpack.c.h.b16 %v30
  %v187 = vunpack.c.l.b16 %v31
  %v188 = vunpack.c.h.b16 %v31
  %v189 = vunpack.c.l.b16 %v32
  %v190 = vunpack.c.h.b16 %v32
  %v191 = vunpack.c.l.b16 %v33
  %v192 = vunpack.c.h.b16 %v33
  %v193 = vunpack.c.l.b16 %v34
  %v194 = vunpack.c.h.b16 %v34
  %v195 = vunpack.c.l.b16 %v35
  %v196 = vunpack.c.h.b16 %v35
  %v197 = vunpack.c.l.b16 %v36
  %v198 = vunpack.c.h.b16 %v36
  %v199 = vunpack.c.l.b16 %v37
  %v200 = vunpack.c.h.b16 %v37
  %v201 = vunpack.c.l.b16 %v38
  %v202 = vunpack.c.h.b16 %v38
  %v203 = vunpack.c.l.b16 %v39
  %v204 = vunpack.c.h.b16 %v39
  %v205 = vunpack.c.l.b16 %v40
  %v206 = vunpack.c.h.b16 %v40
  %v207 = vunpack.c.l.b16 %v41
  %v208 = vunpack.c.h.b16 %v41
  %v209 = vunpack.c.l.b16 %v42
  %v210 = vunpack.c.h.b16 %v42
  %v211 = vunpack.c.l.b16 %v43
  %v212 = vunpack.c.h.b16 %v43
  %v213 = vunpack.c.l.b16 %v44
  %v214 = vunpack.c.h.b16 %v44
  %v215 = vunpack.c.l.b16 %v45
  %v216 = vunpack.c.h.b16 %v45
  %v217 = vunpack.c.l.b16 %v46
  %v218 = vunpack.c.h.b16 %v46
  %v219 = vunpack.c.l.b16 %v47
  %v220 = vunpack.c.h.b16 %v47
  %v221 = vunpack.c.l.b16 %v48
  %v222 = vunpack.c.h.b16 %v48
  %v223 = vunpack.c.l.b16 %v49
  %v224 = vunpack.c.h.b16 %v49
  %v225 = vunpack.c.l.b16 %v50
  %v226 = vunpack.c.h.b16 %v50
  %v227 = vunpack.c.l.b16 %v51
  %v228 = vunpack.c.h.b16 %v51
  %v229 = vunpack.c.l.b16 %v52
  %v230 = vunpack.c.h.b16 %v52
  %v231 = vunpack.c.l.b16 %v53
  %v232 = vunpack.c.h.b16 %v53
  %v233 = vunpack.c.l.b16 %v54
  %v234 = vunpack.c.h.b16 %v54
  %v235 = vunpack.c.l.b16 %v55
  %v236 = vunpack.c.h.b16 %v55
  %v237 = vunpack.c.l.b16 %v56
  %v238 = vunpack.c.h.b16 %v56
  %v239 = vunpack.c.l.b16 %v57
  %v240 = vunpack.c.h.b16 %v57
  %v241 = vunpack.c.l.b16 %v58
  %v242 = vunpack.c.h.b16 %v58
  %v243 = vunpack.c.l.b16 %v59
  %v244 = vunpack.c.h.b16 %v59
  %v245 = vunpack.c.l.b16 %v60
  %v246 = vunpack.c.h.b16 %v60
  %v247 = vunpack.c.l.b16 %v61
  %v248 = vunpack.c.h.b16 %v61
  %v249 = vunpack.c.l.b16 %v62
  %v250 = vunpack.c.h.b16 %v62
  %v251 = vunpack.c.l.b16 %v63
  %v252 = vunpack.c.h.b16 %v63
  %v253 = vunpack.c.l.b16 %v64
  %v254 = vunpack.c.h.b16 %v64
  %v255 = vunpack.c.l.b16 %v65
  %v256 = vunpack.c.h.b16 %v65
  %v257 = vunpack.c.l.b16 %v66
  %v258 = vunpack.c.h.b16 %v66
  %v259 = vunpack.c.l.b16 %v67
  %v260 = vunpack.c.h.b16 %v67
  %v261 = vunpack.c.l.b16 %v68
  %v262 = vunpack.c.h.b16 %v68
  %v263 = vunpack.c.l.b16 %v69
  %v264 = vunpack.c.h.b16 %v69
  %v265 = vunpack.c.l.b16 %v70
  %v266 = vunpack.c.h.b16 %v70
  %v267 = vunpack.c.l.b16 %v71
  %v268 = vunpack.c.h.b16 %v71
  %v269 = vunpack.c.l.b16 %v72
  %v270 = vunpack.c.h.b16 %v72
  %v271 = vunpack.c.l.b16 %v73
  %v272 = vunpack.c.h.b16 %v73
  %v273 = vunpack.c.l.b16 %v74
  %v274 = vunpack.c.h.b16 %v74
  %v275 = vunpack.c.l.b16 %v75
  %v276 = vunpack.c.h.b16 %v75
  %v277 = vunpack.c.l.b16 %v76
  %v278 = vunpack.c.h.b16 %v76
  %v279 = vunpack.c.l.b16 %v77
  %v280 = vunpack.c.h.b16 %v77
  %v281 = vunpack.c.l.b16 %v78
  %v282 = vunpack.c.h.b16 %v78
  %v283 = vunpack.c.l.b16 %v79
  %v284 = vunpack.c.h.b16 %v79
  %v285 = vunpack.c.l.b16 %v80
  %v286 = vunpack.c.h.b16 %v80
  %v287 = vunpack.c.l.b16 %v81
  %v288 = vunpack.c.h.b16 %v81
  %v289 = vunpack.c.l.b16 %v82
  %v290 = vunpack.c.h.b16 %v82
  %v291 = vunpack.c.l.b16 %v83
  %v292 = vunpack.c.h.b16 %v83
  %v293 = vunpack.c.l.b16 %v84
  %v294 = vunpack.c.h.b16 %v84
  %v295 = vunpack.c.l.b16 %v85
  %v296 = vunpack.c.h.b16 %v85
  %v297 = vunpack.c.l.b16 %v86
  %v298 = vunpack.c.h.b16 %v86
  %v299 = vunpack.c.l.b16 %v87
  %v300 = vunpack.c.h.b16 %v87
  %v301 = vunpack.c.l.b16 %v88
  %v302 = vunpack.c.h.b16 %v88
  %v303 = vpack.c.b16 %v179, %v175
  %v304 = vpack.c.b16 %v180, %v176
  %v305 = vpack.c.b16 %v181, %v177
  %v306 = vpack.c.b16 %v182, %v178
  %v307 = vpack.c.b16 %v187, %v183
  %v308 = vpack.c.b16 %v188, %v184
  %v309 = vpack.c.b16 %v189, %v185
  %v310 = vpack.c.b16 %v190, %v186
  %v311 = vpack.c.b16 %v195, %v191
  %v312 = vpack.c.b16 %v196, %v192
  %v313 = vpack.c.b16 %v197, %v193
  %v314 = vpack.c.b16 %v198, %v194
  %v315 = vpack.c.b16 %v203, %v199
  %v316 = vpack.c.b16 %v204, %v200
  %v317 = vpack.c.b16 %v205, %v201
  %v318 = vpack.c.b16 %v206, %v202
  %v319 = vpack.c.b16 %v211, %v207
  %v320 = vpack.c.b16 %v212, %v208
  %v321 = vpack.c.b16 %v213, %v209
  %v322 = vpack.c.b16 %v214, %v210
  %v323 = vpack.c.b16 %v219, %v215
  %v324 = vpack.c.b16 %v220, %v216
  %v325 = vpack.c.b16 %v221, %v217
  %v326 = vpack.c.b16 %v222, %v218
  %v327 = vpack.c.b16 %v227, %v223
  %v328 = vpack.c.b16 %v228, %v224
  %v329 = vpack.c.b16 %v229, %v225
  %v330 = vpack.c.b16 %v230, %v226
  %v331 = vpack.c.b16 %v235, %v231
  %v332 = vpack.c.b16 %v236, %v232
  %v333 = vpack.c.b16 %v237, %v233
  %v334 = vpack.c.b16 %v238, %v234
  %v335 = vpack.c.b16 %v243, %v239
  %v336 = vpack.c.b16 %v244, %v240
  %v337 = vpack.c.b16 %v245, %v241
  %v338 = vpack.c.b16 %v246, %v242
  %v339 = vpack.c.b16 %v251, %v247
  %v340 = vpack.c.b16 %v252, %v248
  %v341 = vpack.c.b16 %v253, %v249
  %v342 = vpack.c.b16 %v254, %v250
  %v343 = vpack.c.b16 %v259, %v255
  %v344 = vpack.c.b16 %v260, %v256
  %v345 = vpack.c.b16 %v261, %v257
  %v346 = vpack.c.b16 %v262, %v258
  %v347 = vpack.c.b16 %v267, %v263
  %v348 = vpack.c.b16 %v268, %v264
  %v349 = vpack.c.b16 %v269, %v265
  %v350 = vpack.c.b16 %v270, %v266
  %v351 = vpack.c.b16 %v275, %v271
  %v352 = vpack.c.b16 %v276, %v272
  %v353 = vpack.c.b16 %v277, %v273
  %v354 = vpack.c.b16 %v278, %v274
  %v355 = vpack.c.b16 %v283, %v279
  %v356 = vpack.c.b16 %v284, %v280
  %v357 = vpack.c.b16 %v285, %v281
  %v358 = vpack.c.b16 %v286, %v282
  %v359 = vpack.c.b16 %v291, %v287
  %v360 = vpack.c.b16 %v292, %v288
  %v361 = vpack.c.b16 %v293, %v289
  %v362 = vpack.c.b16 %v294, %v290
  %v363 = vpack.c.b16 %v299, %v295
  %v364 = vpack.c.b16 %v300, %v296
  %v365 = vpack.c.b16 %v301, %v297
  %v366 = vpack.c.b16 %v302, %v298
  %431 = vmatprep.subr.bf16.mxu0 %v304
  %432 = vmatpush1.bf16.msra.mxu0 %v303
  %433 = vmatprep.subr.bf16.mxu0 %v308
  %434 = vmatpush1.bf16.msra.mxu0 %v307
  %435 = vmatprep.subr.bf16.mxu0 %v312
  %436 = vmatpush1.bf16.msra.mxu0 %v311
  %437 = vmatprep.subr.bf16.mxu0 %v316
  %438 = vmatpush1.bf16.msra.mxu0 %v315
  %439 = vmatprep.subr.bf16.mxu0 %v320
  %440 = vmatpush1.bf16.msra.mxu0 %v319
  %441 = vmatprep.subr.bf16.mxu0 %v324
  %442 = vmatpush1.bf16.msra.mxu0 %v323
  %443 = vmatprep.subr.bf16.mxu0 %v328
  %444 = vmatpush1.bf16.msra.mxu0 %v327
  %445 = vmatprep.subr.bf16.mxu0 %v332
  %446 = vmatpush1.bf16.msra.mxu0 %v331
  %447 = vmatprep.subr.bf16.mxu0 %v336
  %448 = vmatpush1.bf16.msra.mxu0 %v335
  %449 = vmatprep.subr.bf16.mxu0 %v340
  %450 = vmatpush1.bf16.msra.mxu0 %v339
  %451 = vmatprep.subr.bf16.mxu0 %v344
  %452 = vmatpush1.bf16.msra.mxu0 %v343
  %453 = vmatprep.subr.bf16.mxu0 %v348
  %454 = vmatpush1.bf16.msra.mxu0 %v347
  %455 = vmatprep.subr.bf16.mxu0 %v352
  %456 = vmatpush1.bf16.msra.mxu0 %v351
  %457 = vmatprep.subr.bf16.mxu0 %v356
  %458 = vmatpush1.bf16.msra.mxu0 %v355
  %459 = vmatprep.subr.bf16.mxu0 %v360
  %460 = vmatpush1.bf16.msra.mxu0 %v359
  %461 = vmatprep.subr.bf16.mxu0 %v364
  %462 = vmatpush1.bf16.msra.mxu0 %v363
  %463 = vmatprep.mubr.bf16.mxu0 %v24
  %464 = vmatmul.mubr.bf16.gmra.mrb[0].mxu0 %v23
  %v465 = vpop.f32.mrb[0].mxu0
  %v466 = vadd.f32 %v94, %v465
  %v467 = vpop.f32.mrb[0].mxu0
  %v468 = vadd.f32 %v98, %v467
  %v469 = vpop.f32.mrb[0].mxu0
  %v470 = vpop.f32.mrb[0].mxu0
  %471 = vdwg.mxu0
  %472 = vmatprep.subr.bf16.mxu0 %v306
  %473 = vmatpush1.bf16.msra.mxu0 %v305
  %474 = vmatprep.subr.bf16.mxu0 %v310
  %475 = vmatpush1.bf16.msra.mxu0 %v309
  %476 = vmatprep.subr.bf16.mxu0 %v314
  %477 = vmatpush1.bf16.msra.mxu0 %v313
  %478 = vmatprep.subr.bf16.mxu0 %v318
  %479 = vmatpush1.bf16.msra.mxu0 %v317
  %480 = vmatprep.subr.bf16.mxu0 %v322
  %481 = vmatpush1.bf16.msra.mxu0 %v321
  %482 = vmatprep.subr.bf16.mxu0 %v326
  %483 = vmatpush1.bf16.msra.mxu0 %v325
  %484 = vmatprep.subr.bf16.mxu0 %v330
  %485 = vmatpush1.bf16.msra.mxu0 %v329
  %486 = vmatprep.subr.bf16.mxu0 %v334
  %487 = vmatpush1.bf16.msra.mxu0 %v333
  %488 = vmatprep.subr.bf16.mxu0 %v338
  %489 = vmatpush1.bf16.msra.mxu0 %v337
  %490 = vmatprep.subr.bf16.mxu0 %v342
  %491 = vmatpush1.bf16.msra.mxu0 %v341
  %492 = vmatprep.subr.bf16.mxu0 %v346
  %493 = vmatpush1.bf16.msra.mxu0 %v345
  %494 = vmatprep.subr.bf16.mxu0 %v350
  %495 = vmatpush1.bf16.msra.mxu0 %v349
  %496 = vmatprep.subr.bf16.mxu0 %v354
  %497 = vmatpush1.bf16.msra.mxu0 %v353
  %498 = vmatprep.subr.bf16.mxu0 %v358
  %499 = vmatpush1.bf16.msra.mxu0 %v357
  %500 = vmatprep.subr.bf16.mxu0 %v362
  %501 = vmatpush1.bf16.msra.mxu0 %v361
  %502 = vmatprep.subr.bf16.mxu0 %v366
  %503 = vmatpush1.bf16.msra.mxu0 %v365
  %504 = vmatprep.mubr.bf16.mxu0 %v24
  %505 = vmatmul.mubr.bf16.gmra.mrb[0].mxu0 %v23
  %v506 = vpop.f32.mrb[0].mxu0
  %v507 = vadd.f32 %v102, %v506
  %v508 = vpop.f32.mrb[0].mxu0
  %v509 = vadd.f32 %v106, %v508
  %v510 = vpop.f32.mrb[0].mxu0
  %v511 = vpop.f32.mrb[0].mxu0
  %512 = vdwg.mxu0
  %v513 = vmax.f32 %v466, 0.0
  %v514 = vmax.f32 %v468, 0.0
  %v515 = vmax.f32 %v507, 0.0
  %v516 = vmax.f32 %v509, 0.0
  %v517 = vpack.c.bf16 %v513, %v513
  %v518 = vpack.c.bf16 %v514, %v514
  %v519 = vpack.c.bf16 %v515, %v515
  %v520 = vpack.c.bf16 %v516, %v516
  %v521 = vld [vmem:[%s3] sm:$0xf]
  %v522 = vld [vmem:[%s3 + $0x4] sm:$0xf]
  %v523 = vld [vmem:[%s3 + $0x8] sm:$0xf]
  %v524 = vld [vmem:[%s3 + $0xc] sm:$0xf]
  %v525 = vld [vmem:[%s3 + $0x10] sm:$0xf]
  %v526 = vld [vmem:[%s3 + $0x14] sm:$0xf]
  %v527 = vld [vmem:[%s3 + $0x18] sm:$0xf]
  %v528 = vld [vmem:[%s3 + $0x1c] sm:$0xf]
  %v529 = vld [vmem:[%s3 + $0x20] sm:$0xf]
  %v530 = vld [vmem:[%s3 + $0x24] sm:$0xf]
  %v531 = vld [vmem:[%s3 + $0x28] sm:$0xf]
  %v532 = vld [vmem:[%s3 + $0x2c] sm:$0xf]
  %v533 = vld [vmem:[%s3 + $0x30] sm:$0xf]
  %v534 = vld [vmem:[%s3 + $0x34] sm:$0xf]
  %v535 = vld [vmem:[%s3 + $0x38] sm:$0xf]
  %v536 = vld [vmem:[%s3 + $0x3c] sm:$0xf]
  %v537 = vld [vmem:[%s3 + $0x40] sm:$0xf]
  %v538 = vld [vmem:[%s3 + $0x44] sm:$0xf]
  %v539 = vld [vmem:[%s3 + $0x48] sm:$0xf]
  %v540 = vld [vmem:[%s3 + $0x4c] sm:$0xf]
  %v541 = vld [vmem:[%s3 + $0x50] sm:$0xf]
  %v542 = vld [vmem:[%s3 + $0x54] sm:$0xf]
  %v543 = vld [vmem:[%s3 + $0x58] sm:$0xf]
  %v544 = vld [vmem:[%s3 + $0x5c] sm:$0xf]
  %v545 = vld [vmem:[%s3 + $0x60] sm:$0xf]
  %v546 = vld [vmem:[%s3 + $0x64] sm:$0xf]
  %v547 = vld [vmem:[%s3 + $0x68] sm:$0xf]
  %v548 = vld [vmem:[%s3 + $0x6c] sm:$0xf]
  %v549 = vld [vmem:[%s3 + $0x70] sm:$0xf]
  %v550 = vld [vmem:[%s3 + $0x74] sm:$0xf]
  %v551 = vld [vmem:[%s3 + $0x78] sm:$0xf]
  %v552 = vld [vmem:[%s3 + $0x7c] sm:$0xf]
  %v553 = vld [vmem:[%s3 + $0x80] sm:$0xf]
  %v554 = vld [vmem:[%s3 + $0x84] sm:$0xf]
  %v555 = vld [vmem:[%s3 + $0x88] sm:$0xf]
  %v556 = vld [vmem:[%s3 + $0x8c] sm:$0xf]
  %v557 = vld [vmem:[%s3 + $0x90] sm:$0xf]
  %v558 = vld [vmem:[%s3 + $0x94] sm:$0xf]
  %v559 = vld [vmem:[%s3 + $0x98] sm:$0xf]
  %v560 = vld [vmem:[%s3 + $0x9c] sm:$0xf]
  %v561 = vld [vmem:[%s3 + $0xa0] sm:$0xf]
  %v562 = vld [vmem:[%s3 + $0xa4] sm:$0xf]
  %v563 = vld [vmem:[%s3 + $0xa8] sm:$0xf]
  %v564 = vld [vmem:[%s3 + $0xac] sm:$0xf]
  %v565 = vld [vmem:[%s3 + $0xb0] sm:$0xf]
  %v566 = vld [vmem:[%s3 + $0xb4] sm:$0xf]
  %v567 = vld [vmem:[%s3 + $0xb8] sm:$0xf]
  %v568 = vld [vmem:[%s3 + $0xbc] sm:$0xf]
  %v569 = vld [vmem:[%s3 + $0xc0] sm:$0xf]
  %v570 = vld [vmem:[%s3 + $0xc4] sm:$0xf]
  %v571 = vld [vmem:[%s3 + $0xc8] sm:$0xf]
  %v572 = vld [vmem:[%s3 + $0xcc] sm:$0xf]
  %v573 = vld [vmem:[%s3 + $0xd0] sm:$0xf]
  %v574 = vld [vmem:[%s3 + $0xd4] sm:$0xf]
  %v575 = vld [vmem:[%s3 + $0xd8] sm:$0xf]
  %v576 = vld [vmem:[%s3 + $0xdc] sm:$0xf]
  %v577 = vld [vmem:[%s3 + $0xe0] sm:$0xf]
  %v578 = vld [vmem:[%s3 + $0xe4] sm:$0xf]
  %v579 = vld [vmem:[%s3 + $0xe8] sm:$0xf]
  %v580 = vld [vmem:[%s3 + $0xec] sm:$0xf]
  %v581 = vld [vmem:[%s3 + $0xf0] sm:$0xf]
  %v582 = vld [vmem:[%s3 + $0xf4] sm:$0xf]
  %v583 = vld [vmem:[%s3 + $0xf8] sm:$0xf]
  %v584 = vld [vmem:[%s3 + $0xfc] sm:$0xf]
  %v585 = vld [vmem:[%s4] sm:$0x1]
  %v587 = vlaneseq
  %v588 = vshrl.u32 %v587, 7
  %v589 = vsub.s32 0, %v588
  %v590 = vrot.slane %v585, %v589
  %v656 = vunpack.c.l.b16 %v521
  %v657 = vunpack.c.l.b16 %v522
  %v658 = vunpack.c.l.b16 %v523
  %v659 = vunpack.c.l.b16 %v524
  %v660 = vunpack.c.l.b16 %v525
  %v661 = vunpack.c.l.b16 %v526
  %v662 = vunpack.c.l.b16 %v527
  %v663 = vunpack.c.l.b16 %v528
  %v664 = vunpack.c.l.b16 %v529
  %v665 = vunpack.c.l.b16 %v530
  %v666 = vunpack.c.l.b16 %v531
  %v667 = vunpack.c.l.b16 %v532
  %v668 = vunpack.c.l.b16 %v533
  %v669 = vunpack.c.l.b16 %v534
  %v670 = vunpack.c.l.b16 %v535
  %v671 = vunpack.c.l.b16 %v536
  %v672 = vunpack.c.l.b16 %v537
  %v673 = vunpack.c.l.b16 %v538
  %v674 = vunpack.c.l.b16 %v539
  %v675 = vunpack.c.l.b16 %v540
  %v676 = vunpack.c.l.b16 %v541
  %v677 = vunpack.c.l.b16 %v542
  %v678 = vunpack.c.l.b16 %v543
  %v679 = vunpack.c.l.b16 %v544
  %v680 = vunpack.c.l.b16 %v545
  %v681 = vunpack.c.l.b16 %v546
  %v682 = vunpack.c.l.b16 %v547
  %v683 = vunpack.c.l.b16 %v548
  %v684 = vunpack.c.l.b16 %v549
  %v685 = vunpack.c.l.b16 %v550
  %v686 = vunpack.c.l.b16 %v551
  %v687 = vunpack.c.l.b16 %v552
  %v688 = vunpack.c.l.b16 %v553
  %v689 = vunpack.c.l.b16 %v554
  %v690 = vunpack.c.l.b16 %v555
  %v691 = vunpack.c.l.b16 %v556
  %v692 = vunpack.c.l.b16 %v557
  %v693 = vunpack.c.l.b16 %v558
  %v694 = vunpack.c.l.b16 %v559
  %v695 = vunpack.c.l.b16 %v560
  %v696 = vunpack.c.l.b16 %v561
  %v697 = vunpack.c.l.b16 %v562
  %v698 = vunpack.c.l.b16 %v563
  %v699 = vunpack.c.l.b16 %v564
  %v700 = vunpack.c.l.b16 %v565
  %v701 = vunpack.c.l.b16 %v566
  %v702 = vunpack.c.l.b16 %v567
  %v703 = vunpack.c.l.b16 %v568
  %v704 = vunpack.c.l.b16 %v569
  %v705 = vunpack.c.l.b16 %v570
  %v706 = vunpack.c.l.b16 %v571
  %v707 = vunpack.c.l.b16 %v572
  %v708 = vunpack.c.l.b16 %v573
  %v709 = vunpack.c.l.b16 %v574
  %v710 = vunpack.c.l.b16 %v575
  %v711 = vunpack.c.l.b16 %v576
  %v712 = vunpack.c.l.b16 %v577
  %v713 = vunpack.c.l.b16 %v578
  %v714 = vunpack.c.l.b16 %v579
  %v715 = vunpack.c.l.b16 %v580
  %v716 = vunpack.c.l.b16 %v581
  %v717 = vunpack.c.l.b16 %v582
  %v718 = vunpack.c.l.b16 %v583
  %v719 = vunpack.c.l.b16 %v584
  %v720 = vpack.c.b16 %v657, %v656
  %v721 = vpack.c.b16 %v659, %v658
  %v722 = vpack.c.b16 %v661, %v660
  %v723 = vpack.c.b16 %v663, %v662
  %v724 = vpack.c.b16 %v665, %v664
  %v725 = vpack.c.b16 %v667, %v666
  %v726 = vpack.c.b16 %v669, %v668
  %v727 = vpack.c.b16 %v671, %v670
  %v728 = vpack.c.b16 %v673, %v672
  %v729 = vpack.c.b16 %v675, %v674
  %v730 = vpack.c.b16 %v677, %v676
  %v731 = vpack.c.b16 %v679, %v678
  %v732 = vpack.c.b16 %v681, %v680
  %v733 = vpack.c.b16 %v683, %v682
  %v734 = vpack.c.b16 %v685, %v684
  %v735 = vpack.c.b16 %v687, %v686
  %v736 = vpack.c.b16 %v689, %v688
  %v737 = vpack.c.b16 %v691, %v690
  %v738 = vpack.c.b16 %v693, %v692
  %v739 = vpack.c.b16 %v695, %v694
  %v740 = vpack.c.b16 %v697, %v696
  %v741 = vpack.c.b16 %v699, %v698
  %v742 = vpack.c.b16 %v701, %v700
  %v743 = vpack.c.b16 %v703, %v702
  %v744 = vpack.c.b16 %v705, %v704
  %v745 = vpack.c.b16 %v707, %v706
  %v746 = vpack.c.b16 %v709, %v708
  %v747 = vpack.c.b16 %v711, %v710
  %v748 = vpack.c.b16 %v713, %v712
  %v749 = vpack.c.b16 %v715, %v714
  %v750 = vpack.c.b16 %v717, %v716
  %v751 = vpack.c.b16 %v719, %v718
  %784 = vmatprep.subr.bf16.mxu0 0
  %785 = vmatpush1.bf16.msra.mxu0 %v720
  %786 = vmatprep.subr.bf16.mxu0 0
  %787 = vmatpush1.bf16.msra.mxu0 %v721
  %788 = vmatprep.subr.bf16.mxu0 0
  %789 = vmatpush1.bf16.msra.mxu0 %v722
  %790 = vmatprep.subr.bf16.mxu0 0
  %791 = vmatpush1.bf16.msra.mxu0 %v723
  %792 = vmatprep.subr.bf16.mxu0 0
  %793 = vmatpush1.bf16.msra.mxu0 %v724
  %794 = vmatprep.subr.bf16.mxu0 0
  %795 = vmatpush1.bf16.msra.mxu0 %v725
  %796 = vmatprep.subr.bf16.mxu0 0
  %797 = vmatpush1.bf16.msra.mxu0 %v726
  %798 = vmatprep.subr.bf16.mxu0 0
  %799 = vmatpush1.bf16.msra.mxu0 %v727
  %800 = vmatprep.subr.bf16.mxu0 0
  %801 = vmatpush1.bf16.msra.mxu0 %v728
  %802 = vmatprep.subr.bf16.mxu0 0
  %803 = vmatpush1.bf16.msra.mxu0 %v729
  %804 = vmatprep.subr.bf16.mxu0 0
  %805 = vmatpush1.bf16.msra.mxu0 %v730
  %806 = vmatprep.subr.bf16.mxu0 0
  %807 = vmatpush1.bf16.msra.mxu0 %v731
  %808 = vmatprep.subr.bf16.mxu0 0
  %809 = vmatpush1.bf16.msra.mxu0 %v732
  %810 = vmatprep.subr.bf16.mxu0 0
  %811 = vmatpush1.bf16.msra.mxu0 %v733
  %812 = vmatprep.subr.bf16.mxu0 0
  %813 = vmatpush1.bf16.msra.mxu0 %v734
  %814 = vmatprep.subr.bf16.mxu0 0
  %815 = vmatpush1.bf16.msra.mxu0 %v735
  %816 = vmatprep.mubr.bf16.mxu0 %v518
  %817 = vmatmul.mubr.bf16.gmra.mrb[0].mxu0 %v517
  %v818 = vpop.f32.mrb[0].mxu0
  %v819 = vadd.f32 %v590, %v818
  %v820 = vpop.f32.mrb[0].mxu0
  %v821 = vpop.f32.mrb[0].mxu0
  %v822 = vpop.f32.mrb[0].mxu0
  %823 = vdwg.mxu0
  %824 = vmatprep.subr.bf16.mxu0 0
  %825 = vmatpush1.bf16.msra.mxu0 %v736
  %826 = vmatprep.subr.bf16.mxu0 0
  %827 = vmatpush1.bf16.msra.mxu0 %v737
  %828 = vmatprep.subr.bf16.mxu0 0
  %829 = vmatpush1.bf16.msra.mxu0 %v738
  %830 = vmatprep.subr.bf16.mxu0 0
  %831 = vmatpush1.bf16.msra.mxu0 %v739
  %832 = vmatprep.subr.bf16.mxu0 0
  %833 = vmatpush1.bf16.msra.mxu0 %v740
  %834 = vmatprep.subr.bf16.mxu0 0
  %835 = vmatpush1.bf16.msra.mxu0 %v741
  %836 = vmatprep.subr.bf16.mxu0 0
  %837 = vmatpush1.bf16.msra.mxu0 %v742
  %838 = vmatprep.subr.bf16.mxu0 0
  %839 = vmatpush1.bf16.msra.mxu0 %v743
  %840 = vmatprep.subr.bf16.mxu0 0
  %841 = vmatpush1.bf16.msra.mxu0 %v744
  %842 = vmatprep.subr.bf16.mxu0 0
  %843 = vmatpush1.bf16.msra.mxu0 %v745
  %844 = vmatprep.subr.bf16.mxu0 0
  %845 = vmatpush1.bf16.msra.mxu0 %v746
  %846 = vmatprep.subr.bf16.mxu0 0
  %847 = vmatpush1.bf16.msra.mxu0 %v747
  %848 = vmatprep.subr.bf16.mxu0 0
  %849 = vmatpush1.bf16.msra.mxu0 %v748
  %850 = vmatprep.subr.bf16.mxu0 0
  %851 = vmatpush1.bf16.msra.mxu0 %v749
  %852 = vmatprep.subr.bf16.mxu0 0
  %853 = vmatpush1.bf16.msra.mxu0 %v750
  %854 = vmatprep.subr.bf16.mxu0 0
  %855 = vmatpush1.bf16.msra.mxu0 %v751
  %856 = vmatprep.mubr.bf16.mxu0 %v520
  %857 = vmatmul.mubr.bf16.gmra.mrb[0].mxu0 %v519
  %v858 = vpop.f32.mrb[0].mxu0
  %v859 = vadd.f32 %v819, %v858
  %v860 = vpop.f32.mrb[0].mxu0
  %v861 = vpop.f32.mrb[0].mxu0
  %v862 = vpop.f32.mrb[0].mxu0
  %863 = vdwg.mxu0
  %vm864 = vcmask 523264
  %865 = vst.msk [vmem:[%s5] sm:$0xff] %vm864, %v859
  // Predicated region
  $region22: #{_feedforward_nn_impl.1} parent=0 // pred_check
    _
  $region23: #{_feedforward_nn_impl.1} parent=0 // pred_check_branch
    %867 = sbr.rel (0) target = $region25
  $region24: #{_feedforward_nn_impl.1} parent=0 // pred_region
    _
  $region25: #{_feedforward_nn_impl.1} parent=0 // pred_fallthru
    _
  // Predicated region
  $region26: #{_feedforward_nn_impl.1} parent=0 // pred_check
    _
  $region27: #{_feedforward_nn_impl.1} parent=0 // pred_check_branch
    %869 = sbr.rel (0) target = $region29
  $region28: #{_feedforward_nn_impl.1} parent=0 // pred_region
    _
  $region29: #{_feedforward_nn_impl.1} parent=0 // pred_fallthru
    _

</llo_original>
